<compile_context>
chip_gen: v7x
topology: tpu7x:2x2x1
jax: 0.10.0
libtpu: 0.0.40
codegen_flags: <defaults>
</compile_context>

<pallas_src>
import numpy as np

import jax
import jax.numpy as jnp
from jax import lax
from jax.experimental import pallas as pl
from jax.experimental.pallas import tpu as pltpu


# ----------------------------------------------------------------------------
# Pallas kernel: K-tiled matmul with in-kernel (weight + noise), fused epilogue
# ----------------------------------------------------------------------------
def _nlinear_kernel(scale_ref, x_ref, w_ref, n_ref, b_ref, o_ref, acc_ref):
    """One (tm, tn) output tile; grid axis 2 runs over K tiles."""
    k = pl.program_id(2)

    # Weight perturbation happens on-tile: VPU add, hidden under the MXU.
    w = w_ref[...] + n_ref[...]                      # (tn, tk)

    # x (tm, tk) contracted with w (tn, tk) over K -> (tm, tn); no HBM-side
    # transpose of the weights is ever materialized.
    # TODO(synk): verify with pl.lower_as_mlir that no per-tile vxpose is
    # emitted for this contraction on the target generation.
    prod = lax.dot_general(
        x_ref[...], w,
        dimension_numbers=(((1,), (1,)), ((), ())),
        preferred_element_type=jnp.float32)

    @pl.when(k == 0)
    def _():
        acc_ref[...] = prod          # direct write: no zero-init + add pass

    @pl.when(k > 0)
    def _():
        acc_ref[...] += prod

    @pl.when(k == pl.num_programs(2) - 1)
    def _():
        s = scale_ref[0]
        o_ref[...] = (acc_ref[...] * s + b_ref[...]).astype(o_ref.dtype)


# ----------------------------------------------------------------------------
# Static tile-size helpers
# ----------------------------------------------------------------------------
def _round_up(v, m):
    return ((v + m - 1) // m) * m


def _pick_tn(N, max_tile=512):
    """Output-feature tile: lane-dense multiple of 128 (ragged last tile is a
    masked writeback); full N when N < 128."""
    if N < 128:
        return N
    return min(max_tile, (N // 128) * 128)


def _pick_tk(K, max_resident=1024, max_tile=512):
    """Reduction tile.  K blocks must be dense (cannot be masked at writeback),
    so tk must divide the (possibly padded) K exactly."""
    if K <= max_resident:
        return K, K                      # full K resident, one K step
    Kp = _round_up(K, 128)               # zero-pad ragged K (exact no-op)
    for t in (512, 384, 256, 128):
        if Kp % t == 0:
            return Kp, t
    return Kp, 128                       # unreachable (128 | Kp always)


# ----------------------------------------------------------------------------
# Public wrapper: NLinear forward
# ----------------------------------------------------------------------------
@jax.jit
def nlinear_forward(x, weight, noise, bias, scale):
    """out = x @ (weight + noise).T * scale (+ bias).

    x: (..., in_features); weight, noise: (out_features, in_features);
    bias: (out_features,) or None; scale: scalar.  Output dtype == x.dtype.
    """
    *lead, K = x.shape
    N = weight.shape[0]
    M = int(np.prod(lead)) if lead else 1
    dtype = x.dtype

    x2d = x.reshape(M, K)
    w = weight.astype(dtype)             # bf16 models stay bf16 end-to-end
    nz = noise.astype(dtype)

    Kp, tk = _pick_tk(K)
    if Kp != K:
        # Only the reduction axis ever needs explicit zero-padding.
        x2d = jnp.pad(x2d, ((0, 0), (0, Kp - K)))
        w = jnp.pad(w, ((0, 0), (0, Kp - K)))
        nz = jnp.pad(nz, ((0, 0), (0, Kp - K)))

    tm = M if M <= 1024 else 1024        # ragged last M tile -> masked writeback
    tn = _pick_tn(N)
    gm, gn, gk = pl.cdiv(M, tm), pl.cdiv(N, tn), Kp // tk

    # v7x megacore: expose >= 2 parallel output blocks for skinny problems so
    # both TensorCores get work.
    if gm * gn == 1 and tn >= 256 and tn % 256 == 0:
        tn //= 2
        gn = pl.cdiv(N, tn)

    if bias is None:
        bias_row = jnp.zeros((1, N), jnp.float32)
    else:
        bias_row = bias.astype(jnp.float32).reshape(1, N)
    scale_arr = jnp.asarray(scale, dtype=jnp.float32).reshape(1)

    # Weight-streaming-bound regime (decode-like: single M tile, several K
    # steps): deepen weight-side buffering to hide DMA latency.
    wkw = {"pipeline_mode": pl.Buffered(3)} if (gm == 1 and gk >= 3) else {}

    out = pl.pallas_call(
        _nlinear_kernel,
        out_shape=jax.ShapeDtypeStruct((M, N), dtype),
        grid_spec=pltpu.PrefetchScalarGridSpec(
            num_scalar_prefetch=0,
            grid=(gm, gn, gk),
            in_specs=[
                pl.BlockSpec(memory_space=pltpu.SMEM),                  # scale (1,)
                pl.BlockSpec((tm, tk), lambda i, j, k: (i, k)),         # x tile
                pl.BlockSpec((tn, tk), lambda i, j, k: (j, k), **wkw),  # weight tile
                pl.BlockSpec((tn, tk), lambda i, j, k: (j, k), **wkw),  # noise tile
                pl.BlockSpec((1, tn), lambda i, j, k: (0, j)),          # bias row
            ],
            out_specs=pl.BlockSpec((tm, tn), lambda i, j, k: (i, j)),
            scratch_shapes=[pltpu.VMEM((tm, tn), jnp.float32)],         # f32 acc
        ),
        compiler_params=pltpu.CompilerParams(
            dimension_semantics=("parallel", "parallel", "arbitrary"),
            vmem_limit_bytes=40 << 20),
    )(scale_arr, x2d, w, nz, bias_row)

    return out.reshape(*lead, N)


# ----------------------------------------------------------------------------
# Self-test
# ----------------------------------------------------------------------------
if __name__ == "__main__":
    # ---- Test 1: small f32 with bias (single-block path, N < 128) ----------
    batch, seq, in_features, out_features = 2, 8, 32, 32
    kx, kw, kb, kn = jax.random.split(jax.random.PRNGKey(0), 4)

    x = jax.random.normal(kx, (batch, seq, in_features), dtype=jnp.float32)
    bound = 1.0 / np.sqrt(in_features)
    weight = jax.random.uniform(kw, (out_features, in_features), jnp.float32,
                                minval=-bound, maxval=bound)
    bias = jax.random.uniform(kb, (out_features,), jnp.float32,
                              minval=-bound, maxval=bound)
    noise = 0.01 * jax.random.normal(kn, (out_features, in_features), jnp.float32)
    scale = 0.75

    out = jax.block_until_ready(nlinear_forward(x, weight, noise, bias, scale))
    ref = jnp.einsum("bsk,nk->bsn", x, weight + noise) * scale + bias
    np.testing.assert_allclose(np.asarray(out), np.asarray(ref),
                               rtol=1e-3, atol=1e-3)

    # ---- Test 2: bf16, no bias, K-tiled accumulation + ragged N boundary ---
    batch, seq, in_features, out_features = 2, 8, 1536, 300
    kx, kw, kn = jax.random.split(jax.random.PRNGKey(1), 3)

    bound = 1.0 / np.sqrt(in_features)
    x = jax.random.normal(kx, (batch, seq, in_features)).astype(jnp.bfloat16)
    weight = jax.random.uniform(kw, (out_features, in_features),
                                minval=-bound, maxval=bound).astype(jnp.bfloat16)
    noise = (0.01 * jax.random.normal(kn, (out_features, in_features))
             ).astype(jnp.bfloat16)
    scale = 1.25

    out2 = jax.block_until_ready(nlinear_forward(x, weight, noise, None, scale))
    wn = (weight + noise).astype(jnp.float32)        # bf16 add, matches kernel
    ref2 = jnp.einsum("bsk,nk->bsn", x.astype(jnp.float32), wn) * scale
    np.testing.assert_allclose(np.asarray(out2.astype(jnp.float32)),
                               np.asarray(ref2), rtol=2e-2, atol=2e-2)

    print("KERNEL_OK")
</pallas_src>

<mosaic_0001>
module attributes {stable_mosaic.version = 11 : i64} {
  func.func @_nlinear_kernel(%arg0: i32, %arg1: i32, %arg2: i32, %arg3: memref<1xf32, #tpu.memory_space<smem>>, %arg4: memref<16x32xf32, #tpu.memory_space<vmem>>, %arg5: memref<32x32xf32, #tpu.memory_space<vmem>>, %arg6: memref<32x32xf32, #tpu.memory_space<vmem>>, %arg7: memref<1x32xf32, #tpu.memory_space<vmem>>, %arg8: memref<16x32xf32, #tpu.memory_space<vmem>>, %arg9: memref<16x32xf32, #tpu.memory_space<vmem>>) attributes {dimension_semantics = [#tpu.dimension_semantics<parallel>, #tpu.dimension_semantics<parallel>, #tpu.dimension_semantics<arbitrary>], iteration_bounds = array<i64: 1, 1, 1>, scalar_prefetch = 0 : i64, scratch_operands = 1 : i64, tpu.core_type = #tpu.core_type<tc>, window_params = [{transform_indices = @transform_0, window_bounds = array<i64: 1>}, {transform_indices = @transform_1, window_bounds = array<i64: 16, 32>}, {transform_indices = @transform_2, window_bounds = array<i64: 32, 32>}, {transform_indices = @transform_3, window_bounds = array<i64: 32, 32>}, {transform_indices = @transform_4, window_bounds = array<i64: 1, 32>}, {transform_indices = @transform_5, window_bounds = array<i64: 16, 32>}]} {
    %c0 = arith.constant 0 : index
    %c0_0 = arith.constant 0 : index
    %0 = vector.load %arg5[%c0, %c0_0] : memref<32x32xf32, #tpu.memory_space<vmem>>, vector<32x32xf32>
    %c0_1 = arith.constant 0 : index
    %c0_2 = arith.constant 0 : index
    %1 = vector.load %arg6[%c0_1, %c0_2] : memref<32x32xf32, #tpu.memory_space<vmem>>, vector<32x32xf32>
    %2 = arith.addf %0, %1 : vector<32x32xf32>
    %c0_3 = arith.constant 0 : index
    %c0_4 = arith.constant 0 : index
    %3 = vector.load %arg4[%c0_3, %c0_4] : memref<16x32xf32, #tpu.memory_space<vmem>>, vector<16x32xf32>
    %cst = arith.constant dense<0.000000e+00> : vector<16x32xf32>
    %4 = tpu.matmul %3, %2, %cst {dimension_numbers = #tpu.dot_dimension_numbers<[1], [1], [0], [0], [0, 0, 1, 0], [], []>} : vector<16x32xf32>, vector<32x32xf32>, vector<16x32xf32> -> vector<16x32xf32>
    %c0_i32 = arith.constant 0 : i32
    %5 = arith.cmpi eq, %arg2, %c0_i32 : i32
    %6 = arith.extui %5 : i1 to i32
    %c0_i32_5 = arith.constant 0 : i32
    %7 = arith.cmpi ne, %6, %c0_i32_5 : i32
    scf.if %7 {
      %c0_10 = arith.constant 0 : index
      %c0_11 = arith.constant 0 : index
      %14 = vector.load %arg9[%c0_10, %c0_11] : memref<16x32xf32, #tpu.memory_space<vmem>>, vector<16x32xf32>
      tpu.vector_store %arg9[%c0_10, %c0_11], %4 {strides = array<i32>} : memref<16x32xf32, #tpu.memory_space<vmem>>, vector<16x32xf32>,
    } else {
    }
    %c0_i32_6 = arith.constant 0 : i32
    %8 = arith.cmpi sgt, %arg2, %c0_i32_6 : i32
    %9 = arith.extui %8 : i1 to i32
    %c0_i32_7 = arith.constant 0 : i32
    %10 = arith.cmpi ne, %9, %c0_i32_7 : i32
    scf.if %10 {
      %c0_10 = arith.constant 0 : index
      %c0_11 = arith.constant 0 : index
      %14 = vector.load %arg9[%c0_10, %c0_11] : memref<16x32xf32, #tpu.memory_space<vmem>>, vector<16x32xf32>
      %15 = arith.addf %14, %4 : vector<16x32xf32>
      %c0_12 = arith.constant 0 : index
      %c0_13 = arith.constant 0 : index
      %16 = vector.load %arg9[%c0_12, %c0_13] : memref<16x32xf32, #tpu.memory_space<vmem>>, vector<16x32xf32>
      tpu.vector_store %arg9[%c0_12, %c0_13], %15 {strides = array<i32>} : memref<16x32xf32, #tpu.memory_space<vmem>>, vector<16x32xf32>,
    } else {
    }
    %c0_i32_8 = arith.constant 0 : i32
    %11 = arith.cmpi eq, %arg2, %c0_i32_8 : i32
    %12 = arith.extui %11 : i1 to i32
    %c0_i32_9 = arith.constant 0 : i32
    %13 = arith.cmpi ne, %12, %c0_i32_9 : i32
    scf.if %13 {
      %c0_10 = arith.constant 0 : index
      %14 = memref.load %arg3[%c0_10] : memref<1xf32, #tpu.memory_space<smem>>
      %c0_11 = arith.constant 0 : index
      %c0_12 = arith.constant 0 : index
      %15 = vector.load %arg9[%c0_11, %c0_12] : memref<16x32xf32, #tpu.memory_space<vmem>>, vector<16x32xf32>
      %16 = vector.broadcast %14 : f32 to vector<16x32xf32>
      %17 = arith.mulf %15, %16 : vector<16x32xf32>
      %c0_13 = arith.constant 0 : index
      %c0_14 = arith.constant 0 : index
      %18 = vector.load %arg7[%c0_13, %c0_14] : memref<1x32xf32, #tpu.memory_space<vmem>>, vector<1x32xf32>
      %19 = vector.broadcast %18 : vector<1x32xf32> to vector<16x32xf32>
      %20 = arith.addf %17, %19 : vector<16x32xf32>
      %c0_15 = arith.constant 0 : index
      %c0_16 = arith.constant 0 : index
      %21 = vector.load %arg8[%c0_15, %c0_16] : memref<16x32xf32, #tpu.memory_space<vmem>>, vector<16x32xf32>
      tpu.vector_store %arg8[%c0_15, %c0_16], %20 {strides = array<i32>} : memref<16x32xf32, #tpu.memory_space<vmem>>, vector<16x32xf32>,
    } else {
    }
    return
  }
  func.func @transform_0(%arg0: i32, %arg1: i32, %arg2: i32) -> i32 {
    %c0_i32 = arith.constant 0 : i32
    %c0_i32_0 = arith.constant 0 : i32
    return %c0_i32 : i32
  }
  func.func @transform_1(%arg0: i32, %arg1: i32, %arg2: i32) -> (i32, i32) {
    %c0_i32 = arith.constant 0 : i32
    return %arg0, %arg2 : i32, i32
  }
  func.func @transform_2(%arg0: i32, %arg1: i32, %arg2: i32) -> (i32, i32) {
    %c0_i32 = arith.constant 0 : i32
    return %arg1, %arg2 : i32, i32
  }
  func.func @transform_3(%arg0: i32, %arg1: i32, %arg2: i32) -> (i32, i32) {
    %c0_i32 = arith.constant 0 : i32
    return %arg1, %arg2 : i32, i32
  }
  func.func @transform_4(%arg0: i32, %arg1: i32, %arg2: i32) -> (i32, i32) {
    %c0_i32 = arith.constant 0 : i32
    %c0_i32_0 = arith.constant 0 : i32
    return %c0_i32, %arg1 : i32, i32
  }
  func.func @transform_5(%arg0: i32, %arg1: i32, %arg2: i32) -> (i32, i32) {
    %c0_i32 = arith.constant 0 : i32
    return %arg0, %arg1 : i32, i32
  }
}

</mosaic_0001>

<llo_original>
// kernel: nlinear_forward.1
$region0: #{nlinear_forward.1}
  #allocation0 [shape = 'u32[]', space=smem, size = 0x4, offset = 0x4, fixed_abs, tag = 'smem constant byte address 0x4 - core index']
  #allocation1 [shape = 'u32[144,128]{1,0:T(1,128)}', space=vmem, size = 0x12000, scoped, tag = 'internal scratch']
  #allocation2 [shape = 'f32[16,32]{1,0:T(8,128)}', space=vmem, size = 0x2000, scoped, tag = 'scratch operand']
  #allocation3 [shape = 'f32[1]{0:T(128)S(6)}', space=smem, size = 0x200, scoped, tag = 'scoped memory for nlinear_forward.1']
  %s0 = inlined_call_operand.<no memory space> [shape: f32[1], index: 0, kind: input, shape index: {}]
  %s1 = inlined_call_operand.hbm [shape: f32[16,32], index: 1, kind: input, shape index: {}]
  %s2 = inlined_call_operand.hbm [shape: f32[32,32], index: 2, kind: input, shape index: {}]
  %s3 = inlined_call_operand.hbm [shape: f32[32,32], index: 3, kind: input, shape index: {}]
  %s4 = inlined_call_operand.vmem [shape: f32[1,32], index: 4, kind: input, shape index: {}]
  %s5 = inlined_call_operand.hbm [shape: f32[16,32], index: 5, kind: output, shape index: {}]
  %s6 = sld [smem:[#allocation0]]
  $region54: #{nlinear_forward.1} parent=0
    _
  %s8 = ssub.s32 1, %s6
  %s9 = scalar_select 0, %s8, %s6
  %10 = sst [smem:[#allocation3]] %s0
  $region1: #{nlinear_forward.1} parent=0
    #allocation4 [shape = 'u8[8192]{0}', space=vmem, size = 0x2000, scoped, tag = 'input window, operand 1, single buffered']
    #allocation5 [shape = 's32[1]{0}', space=sflag, size = 0x4, scoped, tag = 'scoped memory for nlinear_forward.1']
    #allocation6 [shape = 's32[1]{0}', space=sflag, size = 0x4, scoped, tag = 'scoped memory for nlinear_forward.1']
    #allocation7 [shape = 'u8[16384]{0}', space=vmem, size = 0x4000, scoped, tag = 'input window, operand 2, single buffered']
    #allocation8 [shape = 's32[1]{0}', space=sflag, size = 0x4, scoped, tag = 'scoped memory for nlinear_forward.1']
    #allocation9 [shape = 'u8[16384]{0}', space=vmem, size = 0x4000, scoped, tag = 'input window, operand 3, single buffered']
    #allocation10 [shape = 'u8[8192]{0}', space=vmem, size = 0x2000, scoped, tag = 'output window, operand 0, single buffered']
    %11 = vsyncpa [#allocation5], 0
    %12 = vsyncpa [#allocation8], 0
    %13 = vsyncpa [#allocation6], 0
    // Predicated region
    $region2: #{nlinear_forward.1} parent=1 // pred_check
      _
    $region3: #{nlinear_forward.1} parent=1 // pred_check_branch
      %15 = sbr.rel (0) target = $region5
    $region4: #{nlinear_forward.1} parent=1 // pred_region
      _
    $region5: #{nlinear_forward.1} parent=1 // pred_fallthru
      _
    // Predicated region
    $region6: #{nlinear_forward.1} parent=1 // pred_check
      _
    $region7: #{nlinear_forward.1} parent=1 // pred_check_branch
      %17 = sbr.rel (0) target = $region9
    $region8: #{nlinear_forward.1} parent=1 // pred_region
      %s19 = ssub.s32 256, 256
      %20 = vsyncadd [#allocation5], %s19
      %s21 = sshll.u32 [#allocation4], 4
      %s22 = int_to_ptr.vmem [resolvable:$true] %s21
      %27 = dma.hbm_to_vmem [thread:$0]  %s1, 256, %s22, [#allocation5], 128, 128, 8
    $region9: #{nlinear_forward.1} parent=1 // pred_fallthru
      _
    // Predicated region
    $region10: #{nlinear_forward.1} parent=1 // pred_check
      _
    $region11: #{nlinear_forward.1} parent=1 // pred_check_branch
      %29 = sbr.rel (0) target = $region13
    $region12: #{nlinear_forward.1} parent=1 // pred_region
      %s31 = ssub.s32 512, 512
      %32 = vsyncadd [#allocation8], %s31
      %s33 = sshll.u32 [#allocation7], 4
      %s34 = int_to_ptr.vmem [resolvable:$true] %s33
      %39 = dma.hbm_to_vmem [thread:$0]  %s2, 512, %s34, [#allocation8], 128, 128, 8
    $region13: #{nlinear_forward.1} parent=1 // pred_fallthru
      _
    // Predicated region
    $region14: #{nlinear_forward.1} parent=1 // pred_check
      _
    $region15: #{nlinear_forward.1} parent=1 // pred_check_branch
      %41 = sbr.rel (0) target = $region17
    $region16: #{nlinear_forward.1} parent=1 // pred_region
      %s43 = ssub.s32 512, 512
      %44 = vsyncadd [#allocation8], %s43
      %s45 = sshll.u32 [#allocation9], 4
      %s46 = int_to_ptr.vmem [resolvable:$true] %s45
      %51 = dma.hbm_to_vmem [thread:$0]  %s3, 512, %s46, [#allocation8], 128, 128, 8
    $region17: #{nlinear_forward.1} parent=1 // pred_fallthru
      _
    // Predicated region
    $region18: #{nlinear_forward.1} parent=1 // pred_check
      _
    $region19: #{nlinear_forward.1} parent=1 // pred_check_branch
      %53 = sbr.rel (0) target = $region21
    $region20: #{nlinear_forward.1} parent=1 // pred_region
      _
    $region21: #{nlinear_forward.1} parent=1 // pred_fallthru
      _
    // Predicated region
    $region22: #{nlinear_forward.1} parent=1 // pred_check
      _
    $region23: #{nlinear_forward.1} parent=1 // pred_check_branch
      %55 = sbr.rel (0) target = $region25
    $region24: #{nlinear_forward.1} parent=1 // pred_region
      %56 = dma.done [#allocation5], 256
    $region25: #{nlinear_forward.1} parent=1 // pred_fallthru
      _
    // Predicated region
    $region26: #{nlinear_forward.1} parent=1 // pred_check
      _
    $region27: #{nlinear_forward.1} parent=1 // pred_check_branch
      %58 = sbr.rel (0) target = $region29
    $region28: #{nlinear_forward.1} parent=1 // pred_region
      %59 = dma.done [#allocation8], 512
    $region29: #{nlinear_forward.1} parent=1 // pred_fallthru
      _
    // Predicated region
    $region30: #{nlinear_forward.1} parent=1 // pred_check
      _
    $region31: #{nlinear_forward.1} parent=1 // pred_check_branch
      %61 = sbr.rel (0) target = $region33
    $region32: #{nlinear_forward.1} parent=1 // pred_region
      %62 = dma.done [#allocation8], 512
    $region33: #{nlinear_forward.1} parent=1 // pred_fallthru
      _
    %v63 = vld [vmem:[#allocation7] sm:$0xff]
    %v64 = vld [vmem:[#allocation7 + $0x8] sm:$0xff]
    %v65 = vld [vmem:[#allocation7 + $0x10] sm:$0xff]
    %v66 = vld [vmem:[#allocation7 + $0x18] sm:$0xff]
    %v67 = vld [vmem:[#allocation9] sm:$0xff]
    %v68 = vld [vmem:[#allocation9 + $0x8] sm:$0xff]
    %v69 = vld [vmem:[#allocation9 + $0x10] sm:$0xff]
    %v70 = vld [vmem:[#allocation9 + $0x18] sm:$0xff]
    %v71 = vadd.f32 %v63, %v67
    %v72 = vadd.f32 %v64, %v68
    %v73 = vadd.f32 %v65, %v69
    %v74 = vadd.f32 %v66, %v70
    %v75 = vld [vmem:[#allocation4] sm:$0xff]
    %v76 = vld [vmem:[#allocation4 + $0x8] sm:$0xff]
    %vm77 = vcmask 261120
    %v79 = vsel %vm77, %v75, 0
    %v82 = vsel %vm77, %v76, 0
    %v85 = vsel %vm77, %v71, 0
    %v88 = vsel %vm77, %v72, 0
    %v91 = vsel %vm77, %v73, 0
    %v94 = vsel %vm77, %v74, 0
    %96 = vmatprep.subr.mxu0 0.0
    %97 = vmatpush1.xpose.msra.mxu0 %v85
    %98 = vmatprep.subr.mxu0 0.0
    %99 = vmatpush1.xpose.msra.mxu0 %v88
    %100 = vmatprep.subr.mxu0 0.0
    %101 = vmatpush1.xpose.msra.mxu0 %v91
    %102 = vmatprep.subr.mxu0 0.0
    %103 = vmatpush1.xpose.msra.mxu0 %v94
    %104 = vmatprep.subr.mxu0 0.0
    %105 = vmatpush1.xpose.msra.mxu0 0.0
    %106 = vmatprep.subr.mxu0 0.0
    %107 = vmatpush1.xpose.msra.mxu0 0.0
    %108 = vmatprep.subr.mxu0 0.0
    %109 = vmatpush1.xpose.msra.mxu0 0.0
    %110 = vmatprep.subr.mxu0 0.0
    %111 = vmatpush1.xpose.msra.mxu0 0.0
    %112 = vmatprep.subr.mxu0 0.0
    %113 = vmatpush1.xpose.msra.mxu0 0.0
    %114 = vmatprep.subr.mxu0 0.0
    %115 = vmatpush1.xpose.msra.mxu0 0.0
    %116 = vmatprep.subr.mxu0 0.0
    %117 = vmatpush1.xpose.msra.mxu0 0.0
    %118 = vmatprep.subr.mxu0 0.0
    %119 = vmatpush1.xpose.msra.mxu0 0.0
    %120 = vmatprep.subr.mxu0 0.0
    %121 = vmatpush1.xpose.msra.mxu0 0.0
    %122 = vmatprep.subr.mxu0 0.0
    %123 = vmatpush1.xpose.msra.mxu0 0.0
    %124 = vmatprep.subr.mxu0 0.0
    %125 = vmatpush1.xpose.msra.mxu0 0.0
    %126 = vmatprep.subr.mxu0 0.0
    %127 = vmatpush1.xpose.msra.mxu0 0.0
    %128 = vmatprep.subr.mxu0 0.0
    %129 = vmatpush1.xpose.msra.mxu0 0.0
    %130 = vmatprep.subr.mxu0 0.0
    %131 = vmatpush1.xpose.msra.mxu0 0.0
    %132 = vmatprep.subr.mxu0 0.0
    %133 = vmatpush1.xpose.msra.mxu0 0.0
    %134 = vmatprep.subr.mxu0 0.0
    %135 = vmatpush1.xpose.msra.mxu0 0.0
    %136 = vmatprep.subr.mxu0 0.0
    %137 = vmatpush1.xpose.msra.mxu0 0.0
    %138 = vmatprep.subr.mxu0 0.0
    %139 = vmatpush1.xpose.msra.mxu0 0.0
    %140 = vmatprep.subr.mxu0 0.0
    %141 = vmatpush1.xpose.msra.mxu0 0.0
    %142 = vmatprep.subr.mxu0 0.0
    %143 = vmatpush1.xpose.msra.mxu0 0.0
    %144 = vmatprep.subr.mxu0 0.0
    %145 = vmatpush1.xpose.msra.mxu0 0.0
    %146 = vmatprep.subr.mxu0 0.0
    %147 = vmatpush1.xpose.msra.mxu0 0.0
    %148 = vmatprep.subr.mxu0 0.0
    %149 = vmatpush1.xpose.msra.mxu0 0.0
    %150 = vmatprep.subr.mxu0 0.0
    %151 = vmatpush1.xpose.msra.mxu0 0.0
    %152 = vmatprep.subr.mxu0 0.0
    %153 = vmatpush1.xpose.msra.mxu0 0.0
    %154 = vmatprep.subr.mxu0 0.0
    %155 = vmatpush1.xpose.msra.mxu0 0.0
    %156 = vmatprep.subr.mxu0 0.0
    %157 = vmatpush1.xpose.msra.mxu0 0.0
    %158 = vmatprep.subr.mxu0 0.0
    %159 = vmatpush1.xpose.msra.mxu0 0.0
    %160 = vmatprep.mubr.f32.mxu0 0.0
    %161 = vmatmul.mubr.f32.gmra.mrb[0].mxu0 %v79
    %v162 = vpop.f32.mrb[0].mxu0
    %v163 = vadd.f32 0.0, %v162
    %v164 = vpop.f32.mrb[0].mxu0
    %165 = vmatprep.mubr.f32.mxu0 0.0
    %166 = vmatmul.mubr.f32.gmra.mrb[0].mxu0 %v82
    %v167 = vpop.f32.mrb[0].mxu0
    %v168 = vadd.f32 0.0, %v167
    %v169 = vpop.f32.mrb[0].mxu0
    %170 = vdwg.mxu0
    %p171 = scmp.eq.s32.totalorder 0, 0
    // Predicated region
    $region34: #{nlinear_forward.1} parent=1 // pred_check
      %p172 = pneg %p171
    $region35: #{nlinear_forward.1} parent=1 // pred_check_branch
      %174 = sbr.rel (%p172) target = $region37
    $region36: #{nlinear_forward.1} parent=1 // pred_region
      %175 = vst.msk [vmem:[#allocation2] sm:$0xff] %vm77, %v163
      %176 = vst.msk [vmem:[#allocation2 + $0x8] sm:$0xff] %vm77, %v168
    $region37: #{nlinear_forward.1} parent=1 // pred_fallthru
      _
    %p177 = scmp.gt.s32.totalorder 0, 0
    // Predicated region
    $region38: #{nlinear_forward.1} parent=1 // pred_check
      %p178 = pneg %p177
    $region39: #{nlinear_forward.1} parent=1 // pred_check_branch
      %180 = sbr.rel (%p178) target = $region41
    $region40: #{nlinear_forward.1} parent=1 // pred_region
      %v181 = vld [vmem:[#allocation2] sm:$0xff]
      %v182 = vld [vmem:[#allocation2 + $0x8] sm:$0xff]
      %v183 = vadd.f32 %v181, %v163
      %v184 = vadd.f32 %v182, %v168
      %185 = vst.msk [vmem:[#allocation2] sm:$0xff] %vm77, %v183
      %186 = vst.msk [vmem:[#allocation2 + $0x8] sm:$0xff] %vm77, %v184
    $region41: #{nlinear_forward.1} parent=1 // pred_fallthru
      _
    // Predicated region
    $region42: #{nlinear_forward.1} parent=1 // pred_check
      %p187 = pneg %p171
    $region43: #{nlinear_forward.1} parent=1 // pred_check_branch
      %189 = sbr.rel (%p187) target = $region45
    $region44: #{nlinear_forward.1} parent=1 // pred_region
      %s190 = sld [smem:[#allocation3]]
      %v191 = vld [vmem:[#allocation2] sm:$0xff]
      %v192 = vld [vmem:[#allocation2 + $0x8] sm:$0xff]
      %v193 = vstv %s190
      %v194 = vmul.f32 %v191, %v193
      %v195 = vmul.f32 %v192, %v193
      %v196 = vld [vmem:[%s4] sm:$0x1]
      %v198 = vlaneseq
      %v199 = vshrl.u32 %v198, 7
      %v200 = vsub.s32 0, %v199
      %v201 = vrot.slane %v196, %v200
      %v203 = vadd.f32 %v194, %v201
      %v204 = vadd.f32 %v195, %v201
      %205 = vst.msk [vmem:[#allocation10] sm:$0xff] %vm77, %v203
      %206 = vst.msk [vmem:[#allocation10 + $0x8] sm:$0xff] %vm77, %v204
    $region45: #{nlinear_forward.1} parent=1 // pred_fallthru
      _
    // Predicated region
    $region46: #{nlinear_forward.1} parent=1 // pred_check
      _
    $region47: #{nlinear_forward.1} parent=1 // pred_check_branch
      %208 = sbr.rel (0) target = $region49
    $region48: #{nlinear_forward.1} parent=1 // pred_region
      %s210 = ssub.s32 256, 256
      %211 = vsyncadd [#allocation6], %s210
      %s212 = sshll.u32 [#allocation10], 4
      %s213 = int_to_ptr.vmem [resolvable:$true] %s212
      %218 = dma.vmem_to_hbm [thread:$0]  %s213, 256, %s5, [#allocation6], 128, 128, 8
    $region49: #{nlinear_forward.1} parent=1 // pred_fallthru
      _
    // Predicated region
    $region50: #{nlinear_forward.1} parent=1 // pred_check
      _
    $region51: #{nlinear_forward.1} parent=1 // pred_check_branch
      %220 = sbr.rel (0) target = $region53
    $region52: #{nlinear_forward.1} parent=1 // pred_region
      %221 = dma.done [#allocation6], 256
    $region53: #{nlinear_forward.1} parent=1 // pred_fallthru
      _
    %222 = vsyncpa [#allocation5], 1
    %223 = vsyncpa [#allocation8], 1
    %224 = vsyncpa [#allocation6], 1

</llo_original>
